<compile_context>
chip_gen: v6e
topology: v6e:2x2x1
jax: 0.10.0
libtpu: 0.0.40
codegen_flags: <defaults>
</compile_context>

<pallas_src>
import jax
import jax.numpy as jnp
from jax import lax
from jax.experimental import pallas as pl
from jax.experimental.pallas import tpu as pltpu


def _choose_batch_block(N, C, Cout, L, K, itemsize):
    """Pick how many images to process per grid step."""
    # Per-step VMEM estimate: double-buffered in/out blocks + slab scratch +
    # constants (folded weights, masks). Conservative budget fits v5e's 16 MiB
    # scoped-VMEM default and v7x's 64 MiB physical VMEM with room to spare.
    per_img = L * itemsize * (2 * C + 2 * Cout) + L * 4 * (K * K * C)
    budget = 4 << 20
    nb = max(1, budget // max(per_img, 1))
    nb = min(nb, 16)              # cap the static per-image unroll in the body
    if N >= 2:
        nb = min(nb, N // 2)      # keep >= 2 grid steps so v7x can use both TCs
    nb = max(1, min(nb, N))
    while N % nb:                 # avoid a ragged last block
        nb -= 1
    return nb


def _make_dsc_kernel(H, W, C, Cout, K, Nb, out_dtype):
    L = H * W
    KK = K * K
    # Tap offsets in the flattened (row-major) image, PyTorch cross-correlation
    # order: t = (di+1)*K + (dj+1).
    offsets = [di * W + dj for di in (-1, 0, 1) for dj in (-1, 0, 1)]

    def dsc_kernel(x_ref, wf_ref, mask_ref, out_ref, slab_ref):
        # x_ref:    (Nb, C, L)        Nb images, channels-first, H*W flattened
        # wf_ref:   (Cout, KK*C)      folded pointwise*depthwise weights
        # mask_ref: (KK, L)           per-tap {0,1} edge-validity masks
        # out_ref:  (Nb, Cout, L)     output, already NCHW-flattened
        # slab_ref: (KK*C, L)         VMEM scratch: stacked shifted taps
        wf = wf_ref[...].astype(jnp.float32)                     # (Cout, KK*C)
        masks = [mask_ref[t:t + 1, :] for t in range(KK)]        # each (1, L)

        for i in range(Nb):                                      # static unroll
            xi = x_ref[i].astype(jnp.float32)                    # (C, L)
            for t, off in enumerate(offsets):
                if off == 0:
                    # Center tap: no shift, no edge mask needed.
                    slab_ref[t * C:(t + 1) * C, :] = xi
                else:
                    # shifted[p] = xi[(p + off) mod L]; out-of-image reads are
                    # exactly the positions zeroed by the precomputed mask, so
                    # the wrap reproduces Conv2d's zero padding.
                    shifted = pltpu.roll(xi, shift=(-off) % L, axis=1)
                    slab_ref[t * C:(t + 1) * C, :] = shifted * masks[t]

            # One deep matmul: (Cout, KK*C) @ (KK*C, L) — lane-dense output,
            # f32 accumulation, result already in channels-first order.
            y = jnp.dot(wf, slab_ref[...], preferred_element_type=jnp.float32)
            out_ref[i] = y.astype(out_dtype)

    return dsc_kernel


@jax.jit
def dsc_forward(x_nchw, dw_weight, pw_weight):
    """Depthwise-separable conv forward (k=3, stride=1, padding=1, no bias).

    x_nchw:    (N, C, H, W)
    dw_weight: (C, 1, K, K)     depthwise weights (PyTorch layout)
    pw_weight: (Cout, C, 1, 1)  pointwise weights (PyTorch layout)
    returns:   (N, Cout, H, W)
    """
    N, C, H, W = x_nchw.shape
    K = dw_weight.shape[-1]
    Cout = pw_weight.shape[0]
    assert K == 3, "kernel specialized to the module's k=3 / padding=1 / stride=1 case"
    L = H * W
    KK = K * K

    Nb = _choose_batch_block(N, C, Cout, L, K, x_nchw.dtype.itemsize)
    G = N // Nb

    # Layout-preserving reshape only (no HBM transpose/pad passes).
    x_flat = x_nchw.reshape(N, C, L)

    # Fold depthwise into pointwise: Wf[o, t*C + c] = pw[o, c] * dw[c, t].
    dw_t = dw_weight.reshape(C, KK).T                               # (KK, C)
    wf = (pw_weight.reshape(Cout, 1, C) * dw_t[None, :, :]).reshape(Cout, KK * C)
    wf = wf.astype(jnp.float32)

    # Per-tap {0,1} edge-validity masks over the flattened image, built once.
    rows = jnp.arange(L, dtype=jnp.int32) // W
    cols = jnp.arange(L, dtype=jnp.int32) % W
    mask_rows = []
    for di in (-1, 0, 1):
        for dj in (-1, 0, 1):
            v = jnp.ones((L,), jnp.float32)
            if di == -1:
                v = v * (rows >= 1)
            if di == 1:
                v = v * (rows <= H - 2)
            if dj == -1:
                v = v * (cols >= 1)
            if dj == 1:
                v = v * (cols <= W - 2)
            mask_rows.append(v)
    masks = jnp.stack(mask_rows, axis=0)                            # (KK, L)

    kernel = _make_dsc_kernel(H, W, C, Cout, K, Nb, x_nchw.dtype)

    cost = pl.CostEstimate(
        flops=2 * N * Cout * KK * C * L + N * (KK - 1) * C * L,
        transcendentals=0,
        bytes_accessed=(x_flat.size * x_flat.dtype.itemsize
                        + wf.size * wf.dtype.itemsize
                        + masks.size * masks.dtype.itemsize
                        + N * Cout * L * x_nchw.dtype.itemsize),
    )

    out_flat = pl.pallas_call(
        kernel,
        out_shape=jax.ShapeDtypeStruct((N, Cout, L), x_nchw.dtype),
        grid_spec=pltpu.PrefetchScalarGridSpec(
            num_scalar_prefetch=0,
            grid=(G,),
            in_specs=[
                pl.BlockSpec((Nb, C, L), lambda g: (g, 0, 0)),
                pl.BlockSpec((Cout, KK * C), lambda g: (0, 0)),
                pl.BlockSpec((KK, L), lambda g: (0, 0)),
            ],
            out_specs=pl.BlockSpec((Nb, Cout, L), lambda g: (g, 0, 0)),
            scratch_shapes=[pltpu.VMEM((KK * C, L), jnp.float32)],
        ),
        compiler_params=pltpu.CompilerParams(
            dimension_semantics=("parallel",)),
        cost_estimate=cost,
    )(x_flat, wf, masks)

    # (N, Cout, H*W) -> (N, Cout, H, W): free reshape, no transpose needed.
    return out_flat.reshape(N, Cout, H, W)


def dsc_reference(x_nchw, dw_weight, pw_weight):
    """Pure-JAX reference using lax.conv_general_dilated (matches PyTorch)."""
    C = x_nchw.shape[1]
    y = lax.conv_general_dilated(
        x_nchw, dw_weight, window_strides=(1, 1), padding=((1, 1), (1, 1)),
        feature_group_count=C,
        dimension_numbers=("NCHW", "OIHW", "NCHW"))
    y = lax.conv_general_dilated(
        y, pw_weight, window_strides=(1, 1), padding=((0, 0), (0, 0)),
        dimension_numbers=("NCHW", "OIHW", "NCHW"))
    return y


if __name__ == "__main__":
    # Small shapes consistent with the module.
    N, C, H, W = 2, 4, 16, 16
    Cout, K = 8, 3

    key = jax.random.PRNGKey(0)
    kx, kdw, kpw = jax.random.split(key, 3)
    x = jax.random.normal(kx, (N, C, H, W), dtype=jnp.float32)
    # Deterministic parameter init (Conv2d-like scale), bias=False.
    dw_weight = jax.random.normal(kdw, (C, 1, K, K), dtype=jnp.float32) * (1.0 / (K * K)) ** 0.5
    pw_weight = jax.random.normal(kpw, (Cout, C, 1, 1), dtype=jnp.float32) * (1.0 / C) ** 0.5

    out = jax.block_until_ready(dsc_forward(x, dw_weight, pw_weight))

    ref = jax.block_until_ready(dsc_reference(x, dw_weight, pw_weight))
    assert out.shape == (N, Cout, H, W)
    assert jnp.allclose(out, ref, atol=1e-4, rtol=1e-4), "mismatch vs reference conv"

    print("KERNEL_OK")
</pallas_src>

<mosaic_0001>
module attributes {stable_mosaic.version = 11 : i64} {
  func.func @dsc_kernel(%arg0: i32, %arg1: memref<1x4x256xf32, #tpu.memory_space<vmem>>, %arg2: memref<8x36xf32, #tpu.memory_space<vmem>>, %arg3: memref<9x256xf32, #tpu.memory_space<vmem>>, %arg4: memref<1x8x256xf32, #tpu.memory_space<vmem>>, %arg5: memref<36x256xf32, #tpu.memory_space<vmem>>) attributes {dimension_semantics = [#tpu.dimension_semantics<parallel>], iteration_bounds = array<i64: 2>, scalar_prefetch = 0 : i64, scratch_operands = 1 : i64, tpu.core_type = #tpu.core_type<tc>, window_params = [{transform_indices = @transform_0, window_bounds = array<i64: 1, 4, 256>}, {pipeline_mode = #tpu.pipeline_mode<synchronous>, transform_indices = @transform_1, window_bounds = array<i64: 8, 36>}, {pipeline_mode = #tpu.pipeline_mode<synchronous>, transform_indices = @transform_2, window_bounds = array<i64: 9, 256>}, {transform_indices = @transform_3, window_bounds = array<i64: 1, 8, 256>}]} {
    %c0 = arith.constant 0 : index
    %c0_0 = arith.constant 0 : index
    %0 = vector.load %arg2[%c0, %c0_0] : memref<8x36xf32, #tpu.memory_space<vmem>>, vector<8x36xf32>
    %c0_1 = arith.constant 0 : index
    %c0_2 = arith.constant 0 : index
    %1 = vector.load %arg3[%c0_1, %c0_2] : memref<9x256xf32, #tpu.memory_space<vmem>>, vector<1x256xf32>
    %c1 = arith.constant 1 : index
    %c0_3 = arith.constant 0 : index
    %2 = vector.load %arg3[%c1, %c0_3] : memref<9x256xf32, #tpu.memory_space<vmem>>, vector<1x256xf32>
    %c2 = arith.constant 2 : index
    %c0_4 = arith.constant 0 : index
    %3 = vector.load %arg3[%c2, %c0_4] : memref<9x256xf32, #tpu.memory_space<vmem>>, vector<1x256xf32>
    %c3 = arith.constant 3 : index
    %c0_5 = arith.constant 0 : index
    %4 = vector.load %arg3[%c3, %c0_5] : memref<9x256xf32, #tpu.memory_space<vmem>>, vector<1x256xf32>
    %c5 = arith.constant 5 : index
    %c0_6 = arith.constant 0 : index
    %5 = vector.load %arg3[%c5, %c0_6] : memref<9x256xf32, #tpu.memory_space<vmem>>, vector<1x256xf32>
    %c6 = arith.constant 6 : index
    %c0_7 = arith.constant 0 : index
    %6 = vector.load %arg3[%c6, %c0_7] : memref<9x256xf32, #tpu.memory_space<vmem>>, vector<1x256xf32>
    %c7 = arith.constant 7 : index
    %c0_8 = arith.constant 0 : index
    %7 = vector.load %arg3[%c7, %c0_8] : memref<9x256xf32, #tpu.memory_space<vmem>>, vector<1x256xf32>
    %c8 = arith.constant 8 : index
    %c0_9 = arith.constant 0 : index
    %8 = vector.load %arg3[%c8, %c0_9] : memref<9x256xf32, #tpu.memory_space<vmem>>, vector<1x256xf32>
    %c0_10 = arith.constant 0 : index
    %c0_11 = arith.constant 0 : index
    %c0_12 = arith.constant 0 : index
    %9 = vector.load %arg1[%c0_10, %c0_11, %c0_12] : memref<1x4x256xf32, #tpu.memory_space<vmem>>, vector<1x4x256xf32>
    %10 = vector.shape_cast %9 : vector<1x4x256xf32> to vector<4x256xf32>
    %c17_i32 = arith.constant 17 : i32
    %11 = tpu.dynamic_rotate %10 by %c17_i32 dim 1 : vector<4x256xf32>, i32 -> vector<4x256xf32>
    %12 = vector.broadcast %1 : vector<1x256xf32> to vector<4x256xf32>
    %13 = arith.mulf %11, %12 : vector<4x256xf32>
    %c0_13 = arith.constant 0 : index
    %c0_14 = arith.constant 0 : index
    %14 = vector.load %arg5[%c0_13, %c0_14] : memref<36x256xf32, #tpu.memory_space<vmem>>, vector<4x256xf32>
    tpu.vector_store %arg5[%c0_13, %c0_14], %13 {strides = array<i32>} : memref<36x256xf32, #tpu.memory_space<vmem>>, vector<4x256xf32>,
    %c16_i32 = arith.constant 16 : i32
    %15 = tpu.dynamic_rotate %10 by %c16_i32 dim 1 : vector<4x256xf32>, i32 -> vector<4x256xf32>
    %16 = vector.broadcast %2 : vector<1x256xf32> to vector<4x256xf32>
    %17 = arith.mulf %15, %16 : vector<4x256xf32>
    %c4 = arith.constant 4 : index
    %c0_15 = arith.constant 0 : index
    %18 = vector.load %arg5[%c4, %c0_15] : memref<36x256xf32, #tpu.memory_space<vmem>>, vector<4x256xf32>
    tpu.vector_store %arg5[%c4, %c0_15], %17 {strides = array<i32>} : memref<36x256xf32, #tpu.memory_space<vmem>>, vector<4x256xf32>,
    %c15_i32 = arith.constant 15 : i32
    %19 = tpu.dynamic_rotate %10 by %c15_i32 dim 1 : vector<4x256xf32>, i32 -> vector<4x256xf32>
    %20 = vector.broadcast %3 : vector<1x256xf32> to vector<4x256xf32>
    %21 = arith.mulf %19, %20 : vector<4x256xf32>
    %c8_16 = arith.constant 8 : index
    %c0_17 = arith.constant 0 : index
    %22 = vector.load %arg5[%c8_16, %c0_17] : memref<36x256xf32, #tpu.memory_space<vmem>>, vector<4x256xf32>
    tpu.vector_store %arg5[%c8_16, %c0_17], %21 {strides = array<i32>} : memref<36x256xf32, #tpu.memory_space<vmem>>, vector<4x256xf32>,
    %c1_i32 = arith.constant 1 : i32
    %23 = tpu.dynamic_rotate %10 by %c1_i32 dim 1 : vector<4x256xf32>, i32 -> vector<4x256xf32>
    %24 = vector.broadcast %4 : vector<1x256xf32> to vector<4x256xf32>
    %25 = arith.mulf %23, %24 : vector<4x256xf32>
    %c12 = arith.constant 12 : index
    %c0_18 = arith.constant 0 : index
    %26 = vector.load %arg5[%c12, %c0_18] : memref<36x256xf32, #tpu.memory_space<vmem>>, vector<4x256xf32>
    tpu.vector_store %arg5[%c12, %c0_18], %25 {strides = array<i32>} : memref<36x256xf32, #tpu.memory_space<vmem>>, vector<4x256xf32>,
    %c16 = arith.constant 16 : index
    %c0_19 = arith.constant 0 : index
    %27 = vector.load %arg5[%c16, %c0_19] : memref<36x256xf32, #tpu.memory_space<vmem>>, vector<4x256xf32>
    tpu.vector_store %arg5[%c16, %c0_19], %10 {strides = array<i32>} : memref<36x256xf32, #tpu.memory_space<vmem>>, vector<4x256xf32>,
    %c255_i32 = arith.constant 255 : i32
    %28 = tpu.dynamic_rotate %10 by %c255_i32 dim 1 : vector<4x256xf32>, i32 -> vector<4x256xf32>
    %29 = vector.broadcast %5 : vector<1x256xf32> to vector<4x256xf32>
    %30 = arith.mulf %28, %29 : vector<4x256xf32>
    %c20 = arith.constant 20 : index
    %c0_20 = arith.constant 0 : index
    %31 = vector.load %arg5[%c20, %c0_20] : memref<36x256xf32, #tpu.memory_space<vmem>>, vector<4x256xf32>
    tpu.vector_store %arg5[%c20, %c0_20], %30 {strides = array<i32>} : memref<36x256xf32, #tpu.memory_space<vmem>>, vector<4x256xf32>,
    %c241_i32 = arith.constant 241 : i32
    %32 = tpu.dynamic_rotate %10 by %c241_i32 dim 1 : vector<4x256xf32>, i32 -> vector<4x256xf32>
    %33 = vector.broadcast %6 : vector<1x256xf32> to vector<4x256xf32>
    %34 = arith.mulf %32, %33 : vector<4x256xf32>
    %c24 = arith.constant 24 : index
    %c0_21 = arith.constant 0 : index
    %35 = vector.load %arg5[%c24, %c0_21] : memref<36x256xf32, #tpu.memory_space<vmem>>, vector<4x256xf32>
    tpu.vector_store %arg5[%c24, %c0_21], %34 {strides = array<i32>} : memref<36x256xf32, #tpu.memory_space<vmem>>, vector<4x256xf32>,
    %c240_i32 = arith.constant 240 : i32
    %36 = tpu.dynamic_rotate %10 by %c240_i32 dim 1 : vector<4x256xf32>, i32 -> vector<4x256xf32>
    %37 = vector.broadcast %7 : vector<1x256xf32> to vector<4x256xf32>
    %38 = arith.mulf %36, %37 : vector<4x256xf32>
    %c28 = arith.constant 28 : index
    %c0_22 = arith.constant 0 : index
    %39 = vector.load %arg5[%c28, %c0_22] : memref<36x256xf32, #tpu.memory_space<vmem>>, vector<4x256xf32>
    tpu.vector_store %arg5[%c28, %c0_22], %38 {strides = array<i32>} : memref<36x256xf32, #tpu.memory_space<vmem>>, vector<4x256xf32>,
    %c239_i32 = arith.constant 239 : i32
    %40 = tpu.dynamic_rotate %10 by %c239_i32 dim 1 : vector<4x256xf32>, i32 -> vector<4x256xf32>
    %41 = vector.broadcast %8 : vector<1x256xf32> to vector<4x256xf32>
    %42 = arith.mulf %40, %41 : vector<4x256xf32>
    %c32 = arith.constant 32 : index
    %c0_23 = arith.constant 0 : index
    %43 = vector.load %arg5[%c32, %c0_23] : memref<36x256xf32, #tpu.memory_space<vmem>>, vector<4x256xf32>
    tpu.vector_store %arg5[%c32, %c0_23], %42 {strides = array<i32>} : memref<36x256xf32, #tpu.memory_space<vmem>>, vector<4x256xf32>,
    %c0_24 = arith.constant 0 : index
    %c0_25 = arith.constant 0 : index
    %44 = vector.load %arg5[%c0_24, %c0_25] : memref<36x256xf32, #tpu.memory_space<vmem>>, vector<36x256xf32>
    %cst = arith.constant dense<0.000000e+00> : vector<8x256xf32>
    %45 = tpu.matmul %0, %44, %cst {dimension_numbers = #tpu.dot_dimension_numbers<[1], [0], [0], [1], [0, 0, 1, 1], [], []>} : vector<8x36xf32>, vector<36x256xf32>, vector<8x256xf32> -> vector<8x256xf32>
    %c0_26 = arith.constant 0 : index
    %c0_27 = arith.constant 0 : index
    %c0_28 = arith.constant 0 : index
    %46 = vector.load %arg4[%c0_26, %c0_27, %c0_28] : memref<1x8x256xf32, #tpu.memory_space<vmem>>, vector<1x8x256xf32>
    %47 = vector.shape_cast %46 : vector<1x8x256xf32> to vector<8x256xf32>
    %48 = vector.shape_cast %45 : vector<8x256xf32> to vector<1x8x256xf32>
    tpu.vector_store %arg4[%c0_26, %c0_27, %c0_28], %48 {strides = array<i32>} : memref<1x8x256xf32, #tpu.memory_space<vmem>>, vector<1x8x256xf32>,
    return
  }
  func.func @transform_0(%arg0: i32) -> (i32, i32, i32) {
    %c0_i32 = arith.constant 0 : i32
    %c0_i32_0 = arith.constant 0 : i32
    %c0_i32_1 = arith.constant 0 : i32
    return %arg0, %c0_i32, %c0_i32_0 : i32, i32, i32
  }
  func.func @transform_1(%arg0: i32) -> (i32, i32) {
    %c0_i32 = arith.constant 0 : i32
    %c0_i32_0 = arith.constant 0 : i32
    %c0_i32_1 = arith.constant 0 : i32
    return %c0_i32, %c0_i32_0 : i32, i32
  }
  func.func @transform_2(%arg0: i32) -> (i32, i32) {
    %c0_i32 = arith.constant 0 : i32
    %c0_i32_0 = arith.constant 0 : i32
    %c0_i32_1 = arith.constant 0 : i32
    return %c0_i32, %c0_i32_0 : i32, i32
  }
  func.func @transform_3(%arg0: i32) -> (i32, i32, i32) {
    %c0_i32 = arith.constant 0 : i32
    %c0_i32_0 = arith.constant 0 : i32
    %c0_i32_1 = arith.constant 0 : i32
    return %arg0, %c0_i32, %c0_i32_0 : i32, i32, i32
  }
}

</mosaic_0001>

<llo_original>
// kernel: dsc_forward.1
$region0: #{dsc_forward.1}
  #allocation0 [shape = 'u32[]', space=smem, size = 0x4, offset = 0x4, fixed_abs, tag = 'smem constant byte address 0x4 - core index']
  #allocation1 [shape = 'u32[144,128]{1,0:T(1,128)}', space=vmem, size = 0x12000, scoped, tag = 'internal scratch']
  #allocation2 [shape = 'f32[36,256]{1,0:T(8,128)}', space=vmem, size = 0xa000, scoped, tag = 'scratch operand']
  %s0 = inlined_call_operand.vmem [shape: f32[2,4,256], index: 0, kind: input, shape index: {}]
  %s1 = inlined_call_operand.vmem [shape: f32[8,36], index: 1, kind: input, shape index: {}]
  %s2 = inlined_call_operand.vmem [shape: f32[9,256], index: 2, kind: input, shape index: {}]
  %s3 = inlined_call_operand.vmem [shape: f32[2,8,256], index: 3, kind: output, shape index: {}]
  %s4 = sld [smem:[#allocation0]]
  $region45: #{dsc_forward.1} parent=0
    _
  %s6 = ssub.s32 1, %s4
  %s7 = scalar_select 0, %s6, %s4
  loop: start=0, step=1, limit=4
  $region2: #{dsc_forward.1} parent=0 // loop_pre_header
    _
  $region3: #{dsc_forward.1} parent=0 // loop_header
    %s9 = sphi 0, %s13
    %p10 = scmp.ge.s32.totalorder %s9, 4
    %s19 = sphi 0, %s21
    %s22 = sphi 0, %s19
    %s23 = sphi 0, %s22
    %s39 = sphi 0, %s23
    %s43 = sphi 0, %s43
    %s45 = sphi 0, %s43
    %s46 = sphi 0, %s45
    %s60 = sphi 0, %s46
    %s64 = sphi 0, %s64
    %s66 = sphi 0, %s64
    %s67 = sphi 0, %s66
    %s81 = sphi 0, %s67
    %s87 = sphi 0, %s89
    %s90 = sphi 0, %s87
    %s91 = sphi 0, %s90
    %s107 = sphi 0, %s91
  $region4: #{dsc_forward.1} parent=0 // loop_header_branch
    %12 = sbr.rel (%p10) target = $region8
  $region5: #{dsc_forward.1} parent=0 // loop_body
    %s14 = ssub.s32 %s9, 1
    %s15 = ssub.s32 %s9, 2
    %s16 = sadd.s32 %s9, 1
    %s17 = ssub.s32 %s9, %s16
    %p18 = scmp.eq.s32.totalorder %s17, 0
    %s20 = sadd.s32 %s19, 1
    %s21 = scalar_select %p18, %s19, %s20
    %p24 = pneg %p18
    %p25 = scmp.eq.s32.totalorder %s9, 1
    %p26 = por %p24, %p25
    %p27 = scmp.ne.s32.totalorder %s19, %s22
    %p28 = scmp.eq.s32.totalorder %s9, 0
    %p29 = por %p27, %p28
    %p30 = scmp.ne.s32.totalorder %s19, %s22
    %p31 = scmp.eq.s32.totalorder %s14, 1
    %p32 = por %p30, %p31
    %p33 = scmp.ne.s32.totalorder %s22, %s23
    %p34 = scmp.eq.s32.totalorder %s14, 0
    %p35 = por %p33, %p34
    %p36 = scmp.ne.s32.totalorder %s22, %s23
    %p37 = scmp.eq.s32.totalorder %s15, 1
    %p38 = por %p36, %p37
    %p40 = scmp.ne.s32.totalorder %s23, %s39
    %p41 = scmp.eq.s32.totalorder %s15, 0
    %p42 = por %p40, %p41
    %s44 = sadd.s32 %s43, 1
    %p47 = scmp.eq.s32.totalorder %s9, 1
    %p48 = scmp.ne.s32.totalorder %s43, %s45
    %p49 = scmp.eq.s32.totalorder %s9, 0
    %p50 = por %p48, %p49
    %p51 = scmp.ne.s32.totalorder %s43, %s45
    %p52 = scmp.eq.s32.totalorder %s14, 1
    %p53 = por %p51, %p52
    %p54 = scmp.ne.s32.totalorder %s45, %s46
    %p55 = scmp.eq.s32.totalorder %s14, 0
    %p56 = por %p54, %p55
    %p57 = scmp.ne.s32.totalorder %s45, %s46
    %p58 = scmp.eq.s32.totalorder %s15, 1
    %p59 = por %p57, %p58
    %p61 = scmp.ne.s32.totalorder %s46, %s60
    %p62 = scmp.eq.s32.totalorder %s15, 0
    %p63 = por %p61, %p62
    %s65 = sadd.s32 %s64, 1
    %p68 = scmp.eq.s32.totalorder %s9, 1
    %p69 = scmp.ne.s32.totalorder %s64, %s66
    %p70 = scmp.eq.s32.totalorder %s9, 0
    %p71 = por %p69, %p70
    %p72 = scmp.ne.s32.totalorder %s64, %s66
    %p73 = scmp.eq.s32.totalorder %s14, 1
    %p74 = por %p72, %p73
    %p75 = scmp.ne.s32.totalorder %s66, %s67
    %p76 = scmp.eq.s32.totalorder %s14, 0
    %p77 = por %p75, %p76
    %p78 = scmp.ne.s32.totalorder %s66, %s67
    %p79 = scmp.eq.s32.totalorder %s15, 1
    %p80 = por %p78, %p79
    %p82 = scmp.ne.s32.totalorder %s67, %s81
    %p83 = scmp.eq.s32.totalorder %s15, 0
    %p84 = por %p82, %p83
    %s85 = ssub.s32 %s9, %s16
    %p86 = scmp.eq.s32.totalorder %s85, 0
    %s88 = sadd.s32 %s87, 1
    %s89 = scalar_select %p86, %s87, %s88
    %p92 = pneg %p86
    %p93 = scmp.eq.s32.totalorder %s9, 1
    %p94 = por %p92, %p93
    %p95 = scmp.ne.s32.totalorder %s87, %s90
    %p96 = scmp.eq.s32.totalorder %s9, 0
    %p97 = por %p95, %p96
    %p98 = scmp.ne.s32.totalorder %s87, %s90
    %p99 = scmp.eq.s32.totalorder %s14, 1
    %p100 = por %p98, %p99
    %p101 = scmp.ne.s32.totalorder %s90, %s91
    %p102 = scmp.eq.s32.totalorder %s14, 0
    %p103 = por %p101, %p102
    %p104 = scmp.ne.s32.totalorder %s90, %s91
    %p105 = scmp.eq.s32.totalorder %s15, 1
    %p106 = por %p104, %p105
    %p108 = scmp.ne.s32.totalorder %s91, %s107
    %p109 = scmp.eq.s32.totalorder %s15, 0
    %p110 = por %p108, %p109
    %p111 = scmp.le.s32.totalorder 1, %s9
    %p112 = scmp.lt.s32.totalorder %s9, 3
    %p113 = pnand %p111, %p112
    %p114 = pneg %p113
    // Predicated region
    $region9: #{dsc_forward.1} parent=5 // pred_check
      _
    $region10: #{dsc_forward.1} parent=5 // pred_check_branch
      %116 = sbr.rel (%p113) target = $region12
    $region11: #{dsc_forward.1} parent=5 // pred_region
      %s117 = ssub.s32 %s9, 1
      // Predicated region
      $region13: #{dsc_forward.1} parent=11 // pred_check
        %p118 = pneg %p56
      $region14: #{dsc_forward.1} parent=11 // pred_check_branch
        %120 = sbr.rel (%p118) target = $region16
      $region15: #{dsc_forward.1} parent=11 // pred_region
        _
      $region16: #{dsc_forward.1} parent=11 // pred_fallthru
        _
      // Predicated region
      $region17: #{dsc_forward.1} parent=11 // pred_check
        %p121 = pneg %p77
      $region18: #{dsc_forward.1} parent=11 // pred_check_branch
        %123 = sbr.rel (%p121) target = $region20
      $region19: #{dsc_forward.1} parent=11 // pred_region
        _
      $region20: #{dsc_forward.1} parent=11 // pred_fallthru
        _
    $region12: #{dsc_forward.1} parent=5 // pred_fallthru
      _
    %p124 = scmp.lt.s32.totalorder %s9, 2
    // Predicated region
    $region21: #{dsc_forward.1} parent=5 // pred_check
      %p125 = pneg %p124
    $region22: #{dsc_forward.1} parent=5 // pred_check_branch
      %127 = sbr.rel (%p125) target = $region24
    $region23: #{dsc_forward.1} parent=5 // pred_region
      // Predicated region
      $region25: #{dsc_forward.1} parent=23 // pred_check
        %p128 = pneg %p29
      $region26: #{dsc_forward.1} parent=23 // pred_check_branch
        %130 = sbr.rel (%p128) target = $region28
      $region27: #{dsc_forward.1} parent=23 // pred_region
        %p131 = scmp.lt.s32.totalorder %s9, 1
        %s132 = scalar_select %p131, %s9, 1
        %s133 = smul.addr %s132, 2
        %s134 = smul.addr %s133, 4
        %s135 = scalar_lea.vmem %s0, %s134
      $region28: #{dsc_forward.1} parent=23 // pred_fallthru
        _
    $region24: #{dsc_forward.1} parent=5 // pred_fallthru
      _
    %p136 = scmp.le.s32.totalorder 1, %s9
    %p137 = scmp.lt.s32.totalorder %s9, 3
    %p138 = pnand %p136, %p137
    %p139 = pneg %p138
    // Predicated region
    $region29: #{dsc_forward.1} parent=5 // pred_check
      _
    $region30: #{dsc_forward.1} parent=5 // pred_check_branch
      %141 = sbr.rel (%p138) target = $region32
    $region31: #{dsc_forward.1} parent=5 // pred_region
      %s142 = ssub.s32 %s9, 1
      %p143 = scmp.lt.s32.totalorder %s14, 1
      %s144 = scalar_select %p143, %s14, 1
      %s145 = smul.addr %s144, 2
      %s146 = smul.addr %s145, 4
      %s147 = scalar_lea.vmem %s0, %s146
      %p148 = pneg %p35
      %p149 = pneg %p32
      %p150 = pneg %p56
      %p151 = pneg %p53
      %p152 = pneg %p77
      %p153 = pneg %p74
      %p154 = pneg %p103
      %p155 = pneg %p100
      %p156 = scmp.lt.s32.totalorder %s14, 1
      %s157 = scalar_select %p156, %s14, 1
      %s158 = smul.addr %s157, 2
      %s159 = smul.addr %s158, 8
      %s160 = scalar_lea.vmem %s3, %s159
      %p161 = scmp.lt.s32.totalorder %s14, 1
      %s162 = scalar_select %p161, %s14, 1
      %s163 = smul.addr %s162, 2
      %s164 = smul.addr %s163, 4
      %s165 = scalar_lea.vmem %s0, %s164
      %p166 = scmp.lt.s32.totalorder %s14, 1
      %s167 = scalar_select %p166, %s14, 1
      %s168 = smul.addr %s167, 2
      %s169 = smul.addr %s168, 8
      %s170 = scalar_lea.vmem %s3, %s169
      %v171 = vld [vmem:[%s1] sm:$0xff]
      %v172 = vld [vmem:[%s2] ss:$8 sm:$0x3]
      %s173 = scalar_lea.vmem %s2, 1
      %v174 = vld [vmem:[%s173] ss:$8 sm:$0x3]
      %s175 = scalar_lea.vmem %s2, 2
      %v176 = vld [vmem:[%s175] ss:$8 sm:$0x3]
      %s177 = scalar_lea.vmem %s2, 3
      %v178 = vld [vmem:[%s177] ss:$8 sm:$0x3]
      %s179 = scalar_lea.vmem %s2, 5
      %v180 = vld [vmem:[%s179] ss:$8 sm:$0x3]
      %s181 = scalar_lea.vmem %s2, 6
      %v182 = vld [vmem:[%s181] ss:$8 sm:$0x3]
      %s183 = scalar_lea.vmem %s2, 7
      %v184 = vld [vmem:[%s183] ss:$8 sm:$0x3]
      %s185 = scalar_lea.vmem %s2, 16
      %v186 = vld [vmem:[%s185] ss:$8 sm:$0x3]
      %v187 = vld [vmem:[%s165] sm:$0xff]
      %v189 = vcombine.high %v187, %v187
      %191 = vrot.lane.b32.xlu0 %v187, 17
      %v192 = vpop.permute.xlu0 %191
      %193 = vrot.lane.b32.xlu0 %v189, 17
      %v194 = vpop.permute.xlu0 %193
      %v195 = vlaneseq
      %v196 = vand.u32 %v195, 127
      %vm197 = vcmp.lt.s32.totalorder %v196, 17
      %v198 = vsel %vm197, %v192, %v194
      %v199 = vsel %vm197, %v194, %v192
      %v201 = vlaneseq
      %v202 = vshrl.u32 %v201, 7
      %v203 = vsub.s32 0, %v202
      %v204 = vrot.slane %v172, %v203
      %v205 = vlaneseq
      %v206 = vshrl.u32 %v205, 7
      %v207 = vsub.s32 1, %v206
      %v208 = vrot.slane %v172, %v207
      %v211 = vmul.f32 %v199, %v204
      %v212 = vmul.f32 %v198, %v208
      %213 = vst [vmem:[#allocation2] sm:$0xf] %v211
      %214 = vst [vmem:[#allocation2 + $0x8] sm:$0xf] %v212
      %215 = vrot.lane.b32.xlu0 %v187, 16
      %v216 = vpop.permute.xlu0 %215
      %217 = vrot.lane.b32.xlu0 %v189, 16
      %v218 = vpop.permute.xlu0 %217
      %vm219 = vcmp.lt.s32.totalorder %v196, 16
      %v220 = vsel %vm219, %v216, %v218
      %v221 = vsel %vm219, %v218, %v216
      %v223 = vlaneseq
      %v224 = vshrl.u32 %v223, 7
      %v225 = vsub.s32 0, %v224
      %v226 = vrot.slane %v174, %v225
      %v227 = vlaneseq
      %v228 = vshrl.u32 %v227, 7
      %v229 = vsub.s32 1, %v228
      %v230 = vrot.slane %v174, %v229
      %v233 = vmul.f32 %v221, %v226
      %v234 = vmul.f32 %v220, %v230
      %v237 = vrot.slane %v233, 4
      %v238 = vrot.slane %v234, 4
      %241 = vst [vmem:[#allocation2] sm:$0xf0] %v237
      %242 = vst [vmem:[#allocation2 + $0x8] sm:$0xf0] %v238
      %243 = vrot.lane.b32.xlu0 %v187, 15
      %v244 = vpop.permute.xlu0 %243
      %245 = vrot.lane.b32.xlu0 %v189, 15
      %v246 = vpop.permute.xlu0 %245
      %vm247 = vcmp.lt.s32.totalorder %v196, 15
      %v248 = vsel %vm247, %v244, %v246
      %v249 = vsel %vm247, %v246, %v244
      %v251 = vlaneseq
      %v252 = vshrl.u32 %v251, 7
      %v253 = vsub.s32 0, %v252
      %v254 = vrot.slane %v176, %v253
      %v255 = vlaneseq
      %v256 = vshrl.u32 %v255, 7
      %v257 = vsub.s32 1, %v256
      %v258 = vrot.slane %v176, %v257
      %v261 = vmul.f32 %v249, %v254
      %v262 = vmul.f32 %v248, %v258
      %263 = vst [vmem:[#allocation2 + $0x10] sm:$0xf] %v261
      %264 = vst [vmem:[#allocation2 + $0x18] sm:$0xf] %v262
      %265 = vrot.lane.b32.xlu0 %v187, 1
      %v266 = vpop.permute.xlu0 %265
      %267 = vrot.lane.b32.xlu0 %v189, 1
      %v268 = vpop.permute.xlu0 %267
      %vm269 = vcmp.lt.s32.totalorder %v196, 1
      %v270 = vsel %vm269, %v266, %v268
      %v271 = vsel %vm269, %v268, %v266
      %v273 = vlaneseq
      %v274 = vshrl.u32 %v273, 7
      %v275 = vsub.s32 0, %v274
      %v276 = vrot.slane %v178, %v275
      %v277 = vlaneseq
      %v278 = vshrl.u32 %v277, 7
      %v279 = vsub.s32 1, %v278
      %v280 = vrot.slane %v178, %v279
      %v283 = vmul.f32 %v271, %v276
      %v284 = vmul.f32 %v270, %v280
      %v287 = vrot.slane %v283, 4
      %v288 = vrot.slane %v284, 4
      %291 = vst [vmem:[#allocation2 + $0x10] sm:$0xf0] %v287
      %292 = vst [vmem:[#allocation2 + $0x18] sm:$0xf0] %v288
      %293 = vst [vmem:[#allocation2 + $0x20] sm:$0xf] %v187
      %294 = vst [vmem:[#allocation2 + $0x28] sm:$0xf] %v189
      %295 = vrot.lane.b32.xlu0 %v187, 127
      %v296 = vpop.permute.xlu0 %295
      %297 = vrot.lane.b32.xlu0 %v189, 127
      %v298 = vpop.permute.xlu0 %297
      %vm299 = vcmp.lt.s32.totalorder %v196, 127
      %v300 = vsel %vm299, %v296, %v298
      %v301 = vsel %vm299, %v298, %v296
      %v303 = vlaneseq
      %v304 = vshrl.u32 %v303, 7
      %v305 = vsub.s32 0, %v304
      %v306 = vrot.slane %v180, %v305
      %v307 = vlaneseq
      %v308 = vshrl.u32 %v307, 7
      %v309 = vsub.s32 1, %v308
      %v310 = vrot.slane %v180, %v309
      %v313 = vmul.f32 %v300, %v306
      %v314 = vmul.f32 %v301, %v310
      %v317 = vrot.slane %v313, 4
      %v318 = vrot.slane %v314, 4
      %321 = vst [vmem:[#allocation2 + $0x20] sm:$0xf0] %v317
      %322 = vst [vmem:[#allocation2 + $0x28] sm:$0xf0] %v318
      %323 = vrot.lane.b32.xlu0 %v187, 113
      %v324 = vpop.permute.xlu0 %323
      %325 = vrot.lane.b32.xlu0 %v189, 113
      %v326 = vpop.permute.xlu0 %325
      %vm327 = vcmp.lt.s32.totalorder %v196, 113
      %v328 = vsel %vm327, %v324, %v326
      %v329 = vsel %vm327, %v326, %v324
      %v331 = vlaneseq
      %v332 = vshrl.u32 %v331, 7
      %v333 = vsub.s32 0, %v332
      %v334 = vrot.slane %v182, %v333
      %v335 = vlaneseq
      %v336 = vshrl.u32 %v335, 7
      %v337 = vsub.s32 1, %v336
      %v338 = vrot.slane %v182, %v337
      %v341 = vmul.f32 %v328, %v334
      %v342 = vmul.f32 %v329, %v338
      %343 = vst [vmem:[#allocation2 + $0x30] sm:$0xf] %v341
      %344 = vst [vmem:[#allocation2 + $0x38] sm:$0xf] %v342
      %345 = vrot.lane.b32.xlu0 %v187, 112
      %v346 = vpop.permute.xlu0 %345
      %347 = vrot.lane.b32.xlu0 %v189, 112
      %v348 = vpop.permute.xlu0 %347
      %vm349 = vcmp.lt.s32.totalorder %v196, 112
      %v350 = vsel %vm349, %v346, %v348
      %v351 = vsel %vm349, %v348, %v346
      %v353 = vlaneseq
      %v354 = vshrl.u32 %v353, 7
      %v355 = vsub.s32 0, %v354
      %v356 = vrot.slane %v184, %v355
      %v357 = vlaneseq
      %v358 = vshrl.u32 %v357, 7
      %v359 = vsub.s32 1, %v358
      %v360 = vrot.slane %v184, %v359
      %v363 = vmul.f32 %v350, %v356
      %v364 = vmul.f32 %v351, %v360
      %v367 = vrot.slane %v363, 4
      %v368 = vrot.slane %v364, 4
      %371 = vst [vmem:[#allocation2 + $0x30] sm:$0xf0] %v367
      %372 = vst [vmem:[#allocation2 + $0x38] sm:$0xf0] %v368
      %373 = vrot.lane.b32.xlu0 %v187, 111
      %v374 = vpop.permute.xlu0 %373
      %375 = vrot.lane.b32.xlu0 %v189, 111
      %v376 = vpop.permute.xlu0 %375
      %vm377 = vcmp.lt.s32.totalorder %v196, 111
      %v378 = vsel %vm377, %v374, %v376
      %v379 = vsel %vm377, %v376, %v374
      %v381 = vlaneseq
      %v382 = vshrl.u32 %v381, 7
      %v383 = vsub.s32 0, %v382
      %v384 = vrot.slane %v186, %v383
      %v385 = vlaneseq
      %v386 = vshrl.u32 %v385, 7
      %v387 = vsub.s32 1, %v386
      %v388 = vrot.slane %v186, %v387
      %v391 = vmul.f32 %v378, %v384
      %v392 = vmul.f32 %v379, %v388
      %393 = vst [vmem:[#allocation2 + $0x40] sm:$0xf] %v391
      %394 = vst [vmem:[#allocation2 + $0x48] sm:$0xf] %v392
      %v395 = vld [vmem:[#allocation2] sm:$0xff]
      %v396 = vld [vmem:[#allocation2 + $0x8] sm:$0xff]
      %v397 = vld [vmem:[#allocation2 + $0x10] sm:$0xff]
      %v398 = vld [vmem:[#allocation2 + $0x18] sm:$0xff]
      %v399 = vld [vmem:[#allocation2 + $0x20] sm:$0xff]
      %v400 = vld [vmem:[#allocation2 + $0x28] sm:$0xff]
      %v401 = vld [vmem:[#allocation2 + $0x30] sm:$0xff]
      %v402 = vld [vmem:[#allocation2 + $0x38] sm:$0xff]
      %v403 = vld [vmem:[#allocation2 + $0x40] sm:$0xf]
      %v404 = vld [vmem:[#allocation2 + $0x48] sm:$0xf]
      %vm405 = vcmask 293888
      %v407 = vsel %vm405, %v171, 0
      %vm409 = vcmask 1043456
      %v411 = vsel %vm409, %v403, 0
      %v414 = vsel %vm409, %v404, 0
      %416 = vmatprep.subr.mxu0 0.0
      %417 = vmatpush1.msra.mxu0 0.0
      %418 = vmatprep.subr.mxu0 0.0
      %419 = vmatpush1.msra.mxu0 0.0
      %420 = vmatprep.subr.mxu0 0.0
      %421 = vmatpush1.msra.mxu0 0.0
      %422 = vmatprep.subr.mxu0 0.0
      %423 = vmatpush1.msra.mxu0 0.0
      %424 = vmatprep.subr.mxu0 0.0
      %425 = vmatpush1.msra.mxu0 0.0
      %426 = vmatprep.subr.mxu0 0.0
      %427 = vmatpush1.msra.mxu0 0.0
      %428 = vmatprep.subr.mxu0 0.0
      %429 = vmatpush1.msra.mxu0 0.0
      %430 = vmatprep.subr.mxu0 0.0
      %431 = vmatpush1.msra.mxu0 0.0
      %432 = vmatprep.subr.mxu0 0.0
      %433 = vmatpush1.msra.mxu0 0.0
      %434 = vmatprep.subr.mxu0 0.0
      %435 = vmatpush1.msra.mxu0 0.0
      %436 = vmatprep.subr.mxu0 0.0
      %437 = vmatpush1.msra.mxu0 0.0
      %438 = vmatprep.subr.mxu0 %v414
      %439 = vmatpush1.msra.mxu0 %v411
      %440 = vmatprep.subr.mxu0 %v402
      %441 = vmatpush1.msra.mxu0 %v401
      %442 = vmatprep.subr.mxu0 %v400
      %443 = vmatpush1.msra.mxu0 %v399
      %444 = vmatprep.subr.mxu0 %v398
      %445 = vmatpush1.msra.mxu0 %v397
      %446 = vmatprep.subr.mxu0 %v396
      %447 = vmatpush1.msra.mxu0 %v395
      %448 = vmatprep.subr.mxu0 0.0
      %449 = vmatpush2.msra.mxu0 0.0
      %450 = vmatprep.subr.mxu0 0.0
      %451 = vmatpush2.msra.mxu0 0.0
      %452 = vmatprep.subr.mxu0 0.0
      %453 = vmatpush2.msra.mxu0 0.0
      %454 = vmatprep.subr.mxu0 0.0
      %455 = vmatpush2.msra.mxu0 0.0
      %456 = vmatprep.subr.mxu0 0.0
      %457 = vmatpush2.msra.mxu0 0.0
      %458 = vmatprep.subr.mxu0 0.0
      %459 = vmatpush2.msra.mxu0 0.0
      %460 = vmatprep.subr.mxu0 0.0
      %461 = vmatpush2.msra.mxu0 0.0
      %462 = vmatprep.subr.mxu0 0.0
      %463 = vmatpush2.msra.mxu0 0.0
      %464 = vmatprep.subr.mxu0 0.0
      %465 = vmatpush2.msra.mxu0 0.0
      %466 = vmatprep.subr.mxu0 0.0
      %467 = vmatpush2.msra.mxu0 0.0
      %468 = vmatprep.subr.mxu0 0.0
      %469 = vmatpush2.msra.mxu0 0.0
      %470 = vmatprep.subr.mxu0 0.0
      %471 = vmatpush2.msra.mxu0 0.0
      %472 = vmatprep.subr.mxu0 0.0
      %473 = vmatpush2.msra.mxu0 0.0
      %474 = vmatprep.subr.mxu0 0.0
      %475 = vmatpush2.msra.mxu0 0.0
      %476 = vmatprep.subr.mxu0 0.0
      %477 = vmatpush2.msra.mxu0 0.0
      %478 = vmatprep.subr.mxu0 0.0
      %479 = vmatpush2.msra.mxu0 0.0
      %480 = vmatprep.mubr.f32.mxu0 0.0
      %481 = vmatmul.mubr.f32.gmra.mxu0 %v407
      %v482 = vpop.f32.mrf.mxu0
      %v483 = vadd.f32 0.0, %v482
      %v484 = vpop.f32.mrf.mxu0
      %v485 = vadd.f32 0.0, %v484
      %486 = vdwg.mxu0
      %487 = vst [vmem:[%s170] sm:$0xff] %v483
      %488 = vst [vmem:[%s170 + $0x8] sm:$0xff] %v485
      %p489 = scmp.lt.s32.totalorder %s14, 1
      %s490 = scalar_select %p489, %s14, 1
      %s491 = smul.addr %s490, 2
      %s492 = smul.addr %s491, 8
      %s493 = scalar_lea.vmem %s3, %s492
      // Predicated region
      $region33: #{dsc_forward.1} parent=31 // pred_check
        %p494 = pneg %p100
      $region34: #{dsc_forward.1} parent=31 // pred_check_branch
        %496 = sbr.rel (%p494) target = $region36
      $region35: #{dsc_forward.1} parent=31 // pred_region
        _
      $region36: #{dsc_forward.1} parent=31 // pred_fallthru
        _
    $region32: #{dsc_forward.1} parent=5 // pred_fallthru
      _
    %p497 = scmp.le.s32.totalorder 2, %s9
    // Predicated region
    $region37: #{dsc_forward.1} parent=5 // pred_check
      %p498 = pneg %p497
    $region38: #{dsc_forward.1} parent=5 // pred_check_branch
      %500 = sbr.rel (%p498) target = $region40
    $region39: #{dsc_forward.1} parent=5 // pred_region
      %s501 = ssub.s32 %s9, 2
      // Predicated region
      $region41: #{dsc_forward.1} parent=39 // pred_check
        %p502 = pneg %p106
      $region42: #{dsc_forward.1} parent=39 // pred_check_branch
        %504 = sbr.rel (%p502) target = $region44
      $region43: #{dsc_forward.1} parent=39 // pred_region
        %p505 = scmp.lt.s32.totalorder %s15, 1
        %s506 = scalar_select %p505, %s15, 1
        %s507 = smul.addr %s506, 2
        %s508 = smul.addr %s507, 8
        %s509 = scalar_lea.vmem %s3, %s508
      $region44: #{dsc_forward.1} parent=39 // pred_fallthru
        _
    $region40: #{dsc_forward.1} parent=5 // pred_fallthru
      _
  $region6: #{dsc_forward.1} parent=0 // loop_footer
    %s13 = sadd.s32 1, %s9
  $region7: #{dsc_forward.1} parent=0 // loop_footer_branch
    %8 = sbr.rel target = $region3
  $region8: #{dsc_forward.1} parent=0 // loop_exit
    _

</llo_original>
